<compile_context>
chip_gen: v7x
topology: tpu7x:2x2x1
jax: 0.10.0
libtpu: 0.0.40
codegen_flags: <defaults>
</compile_context>

<pallas_src>
import functools

import jax
import jax.numpy as jnp
from jax.experimental import pallas as pl
from jax.experimental.pallas import tpu as pltpu


def _round_up(n: int, m: int) -> int:
    return ((n + m - 1) // m) * m


def _mlp_kernel(x_ref, w1_ref, b1_ref, w2_ref, b2_ref, o_ref, *, in_size):
    # x_ref:  (TILE_B, in)        w1_ref: (in, hidden)   b1_ref: (1, hidden)
    # w2_ref: (hidden, OUT_PAD)   b2_ref: (1, OUT_PAD)   o_ref:  (TILE_B, OUT_PAD)
    x = x_ref[...]

    if in_size <= 8:
        # K is tiny: skip the MXU and do one VPU broadcast-FMA per feature.
        h = x[:, 0:1] * w1_ref[0:1, :]
        for c in range(1, in_size):
            h = h + x[:, c:c + 1] * w1_ref[c:c + 1, :]
        h = h + b1_ref[...]
    else:
        h = jnp.dot(x, w1_ref[...], preferred_element_type=jnp.float32)
        h = h + b1_ref[...]

    h = jnp.maximum(h, 0.0)  # ReLU (VPU)

    # Second layer: lane-padded (hidden x OUT_PAD) matmul -> dense 128-lane store.
    y = jnp.dot(h, w2_ref[...], preferred_element_type=jnp.float32)
    y = y + b2_ref[...]
    o_ref[...] = y.astype(o_ref.dtype)


def nnet_regression_forward(x, w1, b1, w2, b2, *, tile_b=2048):
    """Forward pass of NNet_regression.  Returns (B, out_size) in x.dtype."""
    B, in_size = x.shape
    hidden = w1.shape[1]
    out_size = w2.shape[1]

    # Lane-dense output slab width (multiple of 128 lanes).
    out_pad = _round_up(max(out_size, 128), 128)

    # Batch tile: multiple of 8 sublanes, no larger than the (padded) batch.
    # VMEM budget (double-buffered x + out blocks) stays a few MiB even at
    # tile_b=2048 with out_pad=128, well inside v7x's 64 MiB physical VMEM.
    tile_b = max(8, _round_up(min(tile_b, _round_up(B, 8)), 8))
    b_pad = _round_up(B, tile_b)

    # Zero-pad batch rows (sliced off at the end) and output lanes of w2/b2.
    x_p = x if b_pad == B else jnp.pad(x, ((0, b_pad - B), (0, 0)))
    w2_p = jnp.pad(w2, ((0, 0), (0, out_pad - out_size)))
    b2_p = jnp.pad(b2, ((0, out_pad - out_size),)).reshape(1, out_pad)
    b1_p = b1.reshape(1, hidden)

    grid = (b_pad // tile_b,)

    flops = 2 * b_pad * in_size * hidden + 2 * b_pad * hidden * out_pad
    bytes_accessed = 4 * (b_pad * in_size + in_size * hidden + hidden
                          + hidden * out_pad + out_pad + b_pad * out_pad)

    kernel = functools.partial(_mlp_kernel, in_size=in_size)

    out_padded = pl.pallas_call(
        kernel,
        out_shape=jax.ShapeDtypeStruct((b_pad, out_pad), x.dtype),
        grid_spec=pltpu.PrefetchScalarGridSpec(
            num_scalar_prefetch=0,
            grid=grid,
            in_specs=[
                pl.BlockSpec((tile_b, in_size), lambda i: (i, 0)),   # x block
                pl.BlockSpec((in_size, hidden), lambda i: (0, 0)),   # w1 resident
                pl.BlockSpec((1, hidden), lambda i: (0, 0)),         # b1 resident
                pl.BlockSpec((hidden, out_pad), lambda i: (0, 0)),   # w2 resident
                pl.BlockSpec((1, out_pad), lambda i: (0, 0)),        # b2 resident
            ],
            out_specs=pl.BlockSpec((tile_b, out_pad), lambda i: (i, 0)),
        ),
        compiler_params=pltpu.CompilerParams(
            dimension_semantics=("parallel",)),   # batch axis: megacore-shardable
        cost_estimate=pl.CostEstimate(
            flops=flops, transcendentals=0, bytes_accessed=bytes_accessed),
    )(x_p, w1, b1_p, w2_p, b2_p)

    return out_padded[:B, :out_size]


def init_params(key, in_size, hidden_size, out_size):
    """Deterministic init mimicking torch.nn.Linear's U(-1/sqrt(fan_in), ...)."""
    k1, k2, k3, k4 = jax.random.split(key, 4)
    bound1 = 1.0 / jnp.sqrt(in_size)
    bound2 = 1.0 / jnp.sqrt(hidden_size)
    # Stored as (in, out) = transpose of PyTorch's (out, in) weight layout.
    w1 = jax.random.uniform(k1, (in_size, hidden_size), jnp.float32, -bound1, bound1)
    b1 = jax.random.uniform(k2, (hidden_size,), jnp.float32, -bound1, bound1)
    w2 = jax.random.uniform(k3, (hidden_size, out_size), jnp.float32, -bound2, bound2)
    b2 = jax.random.uniform(k4, (out_size,), jnp.float32, -bound2, bound2)
    return w1, b1, w2, b2


if __name__ == "__main__":
    # The original module maps 2 features (age, experience) -> salary:
    # in_size=2, out_size=1. hidden_size=128 keeps the vregs lane-full.
    # B=20 with tile_b=8 exercises batch padding (20 -> 24) and a 3-step grid.
    key = jax.random.PRNGKey(0)
    kx, kp = jax.random.split(key)
    B, in_size, hidden_size, out_size = 20, 2, 128, 1

    x = jax.random.normal(kx, (B, in_size), jnp.float32)
    w1, b1, w2, b2 = init_params(kp, in_size, hidden_size, out_size)

    y = nnet_regression_forward(x, w1, b1, w2, b2, tile_b=8)
    jax.block_until_ready(y)

    # Correctness check against a plain-JAX reference of the same forward pass.
    ref = jnp.maximum(x @ w1 + b1, 0.0) @ w2 + b2
    assert y.shape == (B, out_size)
    assert jnp.allclose(y, ref, atol=1e-5, rtol=1e-5)

    print("KERNEL_OK")
</pallas_src>

<mosaic_0001>
module attributes {stable_mosaic.version = 11 : i64} {
  func.func @_mlp_kernel(%arg0: i32, %arg1: memref<8x2xf32, #tpu.memory_space<vmem>>, %arg2: memref<2x128xf32, #tpu.memory_space<vmem>>, %arg3: memref<1x128xf32, #tpu.memory_space<vmem>>, %arg4: memref<128x128xf32, #tpu.memory_space<vmem>>, %arg5: memref<1x128xf32, #tpu.memory_space<vmem>>, %arg6: memref<8x128xf32, #tpu.memory_space<vmem>>) attributes {dimension_semantics = [#tpu.dimension_semantics<parallel>], iteration_bounds = array<i64: 3>, scalar_prefetch = 0 : i64, scratch_operands = 0 : i64, tpu.core_type = #tpu.core_type<tc>, window_params = [{transform_indices = @transform_0, window_bounds = array<i64: 8, 2>}, {pipeline_mode = #tpu.pipeline_mode<synchronous>, transform_indices = @transform_1, window_bounds = array<i64: 2, 128>}, {pipeline_mode = #tpu.pipeline_mode<synchronous>, transform_indices = @transform_2, window_bounds = array<i64: 1, 128>}, {pipeline_mode = #tpu.pipeline_mode<synchronous>, transform_indices = @transform_3, window_bounds = array<i64: 128, 128>}, {pipeline_mode = #tpu.pipeline_mode<synchronous>, transform_indices = @transform_4, window_bounds = array<i64: 1, 128>}, {transform_indices = @transform_5, window_bounds = array<i64: 8, 128>}]} {
    %c0 = arith.constant 0 : index
    %c0_0 = arith.constant 0 : index
    %0 = vector.load %arg1[%c0, %c0_0] : memref<8x2xf32, #tpu.memory_space<vmem>>, vector<8x2xf32>
    %1 = vector.extract_strided_slice %0 {offsets = [0, 0], sizes = [8, 1], strides = [1, 1]} : vector<8x2xf32> to vector<8x1xf32>
    %c0_1 = arith.constant 0 : index
    %c0_2 = arith.constant 0 : index
    %2 = vector.load %arg2[%c0_1, %c0_2] : memref<2x128xf32, #tpu.memory_space<vmem>>, vector<1x128xf32>
    %3 = vector.broadcast %1 : vector<8x1xf32> to vector<8x128xf32>
    %4 = vector.broadcast %2 : vector<1x128xf32> to vector<8x128xf32>
    %5 = arith.mulf %3, %4 : vector<8x128xf32>
    %6 = vector.extract_strided_slice %0 {offsets = [0, 1], sizes = [8, 1], strides = [1, 1]} : vector<8x2xf32> to vector<8x1xf32>
    %c1 = arith.constant 1 : index
    %c0_3 = arith.constant 0 : index
    %7 = vector.load %arg2[%c1, %c0_3] : memref<2x128xf32, #tpu.memory_space<vmem>>, vector<1x128xf32>
    %8 = vector.broadcast %6 : vector<8x1xf32> to vector<8x128xf32>
    %9 = vector.broadcast %7 : vector<1x128xf32> to vector<8x128xf32>
    %10 = arith.mulf %8, %9 : vector<8x128xf32>
    %11 = arith.addf %5, %10 : vector<8x128xf32>
    %c0_4 = arith.constant 0 : index
    %c0_5 = arith.constant 0 : index
    %12 = vector.load %arg3[%c0_4, %c0_5] : memref<1x128xf32, #tpu.memory_space<vmem>>, vector<1x128xf32>
    %13 = vector.broadcast %12 : vector<1x128xf32> to vector<8x128xf32>
    %14 = arith.addf %11, %13 : vector<8x128xf32>
    %cst = arith.constant 0.000000e+00 : f32
    %15 = vector.broadcast %cst : f32 to vector<8x128xf32>
    %16 = arith.maximumf %14, %15 : vector<8x128xf32>
    %c0_6 = arith.constant 0 : index
    %c0_7 = arith.constant 0 : index
    %17 = vector.load %arg4[%c0_6, %c0_7] : memref<128x128xf32, #tpu.memory_space<vmem>>, vector<128x128xf32>
    %cst_8 = arith.constant dense<0.000000e+00> : vector<8x128xf32>
    %18 = tpu.matmul %16, %17, %cst_8 {dimension_numbers = #tpu.dot_dimension_numbers<[1], [0], [0], [1], [0, 0, 1, 1], [], []>} : vector<8x128xf32>, vector<128x128xf32>, vector<8x128xf32> -> vector<8x128xf32>
    %c0_9 = arith.constant 0 : index
    %c0_10 = arith.constant 0 : index
    %19 = vector.load %arg5[%c0_9, %c0_10] : memref<1x128xf32, #tpu.memory_space<vmem>>, vector<1x128xf32>
    %20 = vector.broadcast %19 : vector<1x128xf32> to vector<8x128xf32>
    %21 = arith.addf %18, %20 : vector<8x128xf32>
    %c0_11 = arith.constant 0 : index
    %c0_12 = arith.constant 0 : index
    %22 = vector.load %arg6[%c0_11, %c0_12] : memref<8x128xf32, #tpu.memory_space<vmem>>, vector<8x128xf32>
    tpu.vector_store %arg6[%c0_11, %c0_12], %21 {strides = array<i32>} : memref<8x128xf32, #tpu.memory_space<vmem>>, vector<8x128xf32>,
    return
  }
  func.func @transform_0(%arg0: i32) -> (i32, i32) {
    %c0_i32 = arith.constant 0 : i32
    %c0_i32_0 = arith.constant 0 : i32
    return %arg0, %c0_i32 : i32, i32
  }
  func.func @transform_1(%arg0: i32) -> (i32, i32) {
    %c0_i32 = arith.constant 0 : i32
    %c0_i32_0 = arith.constant 0 : i32
    %c0_i32_1 = arith.constant 0 : i32
    return %c0_i32, %c0_i32_0 : i32, i32
  }
  func.func @transform_2(%arg0: i32) -> (i32, i32) {
    %c0_i32 = arith.constant 0 : i32
    %c0_i32_0 = arith.constant 0 : i32
    %c0_i32_1 = arith.constant 0 : i32
    return %c0_i32, %c0_i32_0 : i32, i32
  }
  func.func @transform_3(%arg0: i32) -> (i32, i32) {
    %c0_i32 = arith.constant 0 : i32
    %c0_i32_0 = arith.constant 0 : i32
    %c0_i32_1 = arith.constant 0 : i32
    return %c0_i32, %c0_i32_0 : i32, i32
  }
  func.func @transform_4(%arg0: i32) -> (i32, i32) {
    %c0_i32 = arith.constant 0 : i32
    %c0_i32_0 = arith.constant 0 : i32
    %c0_i32_1 = arith.constant 0 : i32
    return %c0_i32, %c0_i32_0 : i32, i32
  }
  func.func @transform_5(%arg0: i32) -> (i32, i32) {
    %c0_i32 = arith.constant 0 : i32
    %c0_i32_0 = arith.constant 0 : i32
    return %arg0, %c0_i32 : i32, i32
  }
}

</mosaic_0001>

<llo_original>
// kernel: tpu_custom_call.1
$region0: #{tpu_custom_call.1}
  #allocation0 [shape = 'u32[]', space=smem, size = 0x4, offset = 0x4, fixed_abs, tag = 'smem constant byte address 0x4 - core index']
  #allocation1 [shape = 'u32[144,128]{1,0:T(1,128)}', space=vmem, size = 0x12000, scoped, tag = 'internal scratch']
  %s0 = inlined_call_operand.vmem [shape: f32[24,2], index: 0, kind: input, shape index: {}]
  %s1 = inlined_call_operand.vmem [shape: f32[2,128], index: 1, kind: input, shape index: {}]
  %s2 = inlined_call_operand.vmem [shape: f32[1,128], index: 2, kind: input, shape index: {}]
  %s3 = inlined_call_operand.hbm [shape: f32[128,128], index: 3, kind: input, shape index: {}]
  %s4 = inlined_call_operand.vmem [shape: f32[1,128], index: 4, kind: input, shape index: {}]
  %s5 = inlined_call_operand.hbm [shape: f32[24,128], index: 5, kind: output, shape index: {}]
  %s6 = sld [smem:[#allocation0]]
  $region57: #{tpu_custom_call.1} parent=0
    _
  %s8 = ssub.s32 1, %s6
  %s9 = scalar_select 0, %s8, %s6
  $region1: #{tpu_custom_call.1} parent=0
    #allocation2 [shape = 'u8[65536]{0}', space=vmem, size = 0x10000, scoped, tag = 'input window, operand 3, single buffered']
    #allocation3 [shape = 's32[2]{0}', space=sflag, size = 0x8, scoped, tag = 'scoped memory for tpu_custom_call.1']
    #allocation4 [shape = 's32[2]{0}', space=sflag, size = 0x8, scoped, tag = 'scoped memory for tpu_custom_call.1']
    #allocation5 [shape = 'u8[8192]{0}', space=vmem, size = 0x2000, scoped, tag = 'output window, operand 0']
    %10 = vsyncpa [#allocation3], 0
    %11 = vsyncpa [#allocation4], 0
    %s12 = scalar_lea.sflag [#allocation4], 1
    %13 = vsyncpa %s12, 0
    loop: start=0, step=1, limit=5
    $region2: #{tpu_custom_call.1} parent=1 // loop_pre_header
      _
    $region3: #{tpu_custom_call.1} parent=1 // loop_header
      %s15 = sphi 0, %s19
      %p16 = scmp.ge.s32.totalorder %s15, 5
      %s25 = sphi 0, %s27
      %s28 = sphi 0, %s25
      %s29 = sphi 0, %s28
      %s45 = sphi 0, %s29
      %s49 = sphi 0, %s49
      %s51 = sphi 0, %s49
      %s52 = sphi 0, %s51
      %s66 = sphi 0, %s52
      %s70 = sphi 0, %s70
      %s72 = sphi 0, %s70
      %s73 = sphi 0, %s72
      %s87 = sphi 0, %s73
      %s91 = sphi 0, %s91
      %s93 = sphi 0, %s91
      %s94 = sphi 0, %s93
      %s108 = sphi 0, %s94
      %s112 = sphi 0, %s112
      %s114 = sphi 0, %s112
      %s115 = sphi 0, %s114
      %s129 = sphi 0, %s115
      %s135 = sphi 0, %s137
      %s138 = sphi 0, %s135
      %s139 = sphi 0, %s138
      %s155 = sphi 0, %s139
    $region4: #{tpu_custom_call.1} parent=1 // loop_header_branch
      %18 = sbr.rel (%p16) target = $region8
    $region5: #{tpu_custom_call.1} parent=1 // loop_body
      %s20 = ssub.s32 %s15, 1
      %s21 = ssub.s32 %s15, 2
      %s22 = sadd.s32 %s15, 1
      %s23 = ssub.s32 %s15, %s22
      %p24 = scmp.eq.s32.totalorder %s23, 0
      %s26 = sadd.s32 %s25, 1
      %s27 = scalar_select %p24, %s25, %s26
      %p30 = pneg %p24
      %p31 = scmp.eq.s32.totalorder %s15, 2
      %p32 = por %p30, %p31
      %p33 = scmp.ne.s32.totalorder %s25, %s28
      %p34 = scmp.eq.s32.totalorder %s15, 0
      %p35 = por %p33, %p34
      %p36 = scmp.ne.s32.totalorder %s25, %s28
      %p37 = scmp.eq.s32.totalorder %s20, 2
      %p38 = por %p36, %p37
      %p39 = scmp.ne.s32.totalorder %s28, %s29
      %p40 = scmp.eq.s32.totalorder %s20, 0
      %p41 = por %p39, %p40
      %p42 = scmp.ne.s32.totalorder %s28, %s29
      %p43 = scmp.eq.s32.totalorder %s21, 2
      %p44 = por %p42, %p43
      %p46 = scmp.ne.s32.totalorder %s29, %s45
      %p47 = scmp.eq.s32.totalorder %s21, 0
      %p48 = por %p46, %p47
      %s50 = sadd.s32 %s49, 1
      %p53 = scmp.eq.s32.totalorder %s15, 2
      %p54 = scmp.ne.s32.totalorder %s49, %s51
      %p55 = scmp.eq.s32.totalorder %s15, 0
      %p56 = por %p54, %p55
      %p57 = scmp.ne.s32.totalorder %s49, %s51
      %p58 = scmp.eq.s32.totalorder %s20, 2
      %p59 = por %p57, %p58
      %p60 = scmp.ne.s32.totalorder %s51, %s52
      %p61 = scmp.eq.s32.totalorder %s20, 0
      %p62 = por %p60, %p61
      %p63 = scmp.ne.s32.totalorder %s51, %s52
      %p64 = scmp.eq.s32.totalorder %s21, 2
      %p65 = por %p63, %p64
      %p67 = scmp.ne.s32.totalorder %s52, %s66
      %p68 = scmp.eq.s32.totalorder %s21, 0
      %p69 = por %p67, %p68
      %s71 = sadd.s32 %s70, 1
      %p74 = scmp.eq.s32.totalorder %s15, 2
      %p75 = scmp.ne.s32.totalorder %s70, %s72
      %p76 = scmp.eq.s32.totalorder %s15, 0
      %p77 = por %p75, %p76
      %p78 = scmp.ne.s32.totalorder %s70, %s72
      %p79 = scmp.eq.s32.totalorder %s20, 2
      %p80 = por %p78, %p79
      %p81 = scmp.ne.s32.totalorder %s72, %s73
      %p82 = scmp.eq.s32.totalorder %s20, 0
      %p83 = por %p81, %p82
      %p84 = scmp.ne.s32.totalorder %s72, %s73
      %p85 = scmp.eq.s32.totalorder %s21, 2
      %p86 = por %p84, %p85
      %p88 = scmp.ne.s32.totalorder %s73, %s87
      %p89 = scmp.eq.s32.totalorder %s21, 0
      %p90 = por %p88, %p89
      %s92 = sadd.s32 %s91, 1
      %p95 = scmp.eq.s32.totalorder %s15, 2
      %p96 = scmp.ne.s32.totalorder %s91, %s93
      %p97 = scmp.eq.s32.totalorder %s15, 0
      %p98 = por %p96, %p97
      %p99 = scmp.ne.s32.totalorder %s91, %s93
      %p100 = scmp.eq.s32.totalorder %s20, 2
      %p101 = por %p99, %p100
      %p102 = scmp.ne.s32.totalorder %s93, %s94
      %p103 = scmp.eq.s32.totalorder %s20, 0
      %p104 = por %p102, %p103
      %p105 = scmp.ne.s32.totalorder %s93, %s94
      %p106 = scmp.eq.s32.totalorder %s21, 2
      %p107 = por %p105, %p106
      %p109 = scmp.ne.s32.totalorder %s94, %s108
      %p110 = scmp.eq.s32.totalorder %s21, 0
      %p111 = por %p109, %p110
      %s113 = sadd.s32 %s112, 1
      %p116 = scmp.eq.s32.totalorder %s15, 2
      %p117 = scmp.ne.s32.totalorder %s112, %s114
      %p118 = scmp.eq.s32.totalorder %s15, 0
      %p119 = por %p117, %p118
      %p120 = scmp.ne.s32.totalorder %s112, %s114
      %p121 = scmp.eq.s32.totalorder %s20, 2
      %p122 = por %p120, %p121
      %p123 = scmp.ne.s32.totalorder %s114, %s115
      %p124 = scmp.eq.s32.totalorder %s20, 0
      %p125 = por %p123, %p124
      %p126 = scmp.ne.s32.totalorder %s114, %s115
      %p127 = scmp.eq.s32.totalorder %s21, 2
      %p128 = por %p126, %p127
      %p130 = scmp.ne.s32.totalorder %s115, %s129
      %p131 = scmp.eq.s32.totalorder %s21, 0
      %p132 = por %p130, %p131
      %s133 = ssub.s32 %s15, %s22
      %p134 = scmp.eq.s32.totalorder %s133, 0
      %s136 = sadd.s32 %s135, 1
      %s137 = scalar_select %p134, %s135, %s136
      %p140 = pneg %p134
      %p141 = scmp.eq.s32.totalorder %s15, 2
      %p142 = por %p140, %p141
      %p143 = scmp.ne.s32.totalorder %s135, %s138
      %p144 = scmp.eq.s32.totalorder %s15, 0
      %p145 = por %p143, %p144
      %p146 = scmp.ne.s32.totalorder %s135, %s138
      %p147 = scmp.eq.s32.totalorder %s20, 2
      %p148 = por %p146, %p147
      %p149 = scmp.ne.s32.totalorder %s138, %s139
      %p150 = scmp.eq.s32.totalorder %s20, 0
      %p151 = por %p149, %p150
      %p152 = scmp.ne.s32.totalorder %s138, %s139
      %p153 = scmp.eq.s32.totalorder %s21, 2
      %p154 = por %p152, %p153
      %p156 = scmp.ne.s32.totalorder %s139, %s155
      %p157 = scmp.eq.s32.totalorder %s21, 0
      %p158 = por %p156, %p157
      %p159 = scmp.le.s32.totalorder 1, %s15
      %p160 = scmp.lt.s32.totalorder %s15, 4
      %p161 = pnand %p159, %p160
      %p162 = pneg %p161
      // Predicated region
      $region9: #{tpu_custom_call.1} parent=5 // pred_check
        _
      $region10: #{tpu_custom_call.1} parent=5 // pred_check_branch
        %164 = sbr.rel (%p161) target = $region12
      $region11: #{tpu_custom_call.1} parent=5 // pred_region
        %s165 = ssub.s32 %s15, 1
        // Predicated region
        $region13: #{tpu_custom_call.1} parent=11 // pred_check
          %p166 = pneg %p62
        $region14: #{tpu_custom_call.1} parent=11 // pred_check_branch
          %168 = sbr.rel (%p166) target = $region16
        $region15: #{tpu_custom_call.1} parent=11 // pred_region
          _
        $region16: #{tpu_custom_call.1} parent=11 // pred_fallthru
          _
        // Predicated region
        $region17: #{tpu_custom_call.1} parent=11 // pred_check
          %p169 = pneg %p83
        $region18: #{tpu_custom_call.1} parent=11 // pred_check_branch
          %171 = sbr.rel (%p169) target = $region20
        $region19: #{tpu_custom_call.1} parent=11 // pred_region
          _
        $region20: #{tpu_custom_call.1} parent=11 // pred_fallthru
          _
        // Predicated region
        $region21: #{tpu_custom_call.1} parent=11 // pred_check
          %p172 = pneg %p104
        $region22: #{tpu_custom_call.1} parent=11 // pred_check_branch
          %174 = sbr.rel (%p172) target = $region24
        $region23: #{tpu_custom_call.1} parent=11 // pred_region
          %s176 = ssub.s32 2048, 2048
          %177 = vsyncadd [#allocation3], %s176
          %s178 = sshll.u32 [#allocation2], 4
          %s179 = int_to_ptr.vmem [resolvable:$true] %s178
          %184 = dma.hbm_to_vmem [thread:$0]  %s3, 2048, %s179, [#allocation3], 128, 128, 8
        $region24: #{tpu_custom_call.1} parent=11 // pred_fallthru
          _
        // Predicated region
        $region25: #{tpu_custom_call.1} parent=11 // pred_check
          %p185 = pneg %p125
        $region26: #{tpu_custom_call.1} parent=11 // pred_check_branch
          %187 = sbr.rel (%p185) target = $region28
        $region27: #{tpu_custom_call.1} parent=11 // pred_region
          _
        $region28: #{tpu_custom_call.1} parent=11 // pred_fallthru
          _
      $region12: #{tpu_custom_call.1} parent=5 // pred_fallthru
        _
      %p188 = scmp.lt.s32.totalorder %s15, 3
      // Predicated region
      $region29: #{tpu_custom_call.1} parent=5 // pred_check
        %p189 = pneg %p188
      $region30: #{tpu_custom_call.1} parent=5 // pred_check_branch
        %191 = sbr.rel (%p189) target = $region32
      $region31: #{tpu_custom_call.1} parent=5 // pred_region
        // Predicated region
        $region33: #{tpu_custom_call.1} parent=31 // pred_check
          %p192 = pneg %p35
        $region34: #{tpu_custom_call.1} parent=31 // pred_check_branch
          %194 = sbr.rel (%p192) target = $region36
        $region35: #{tpu_custom_call.1} parent=31 // pred_region
          %p195 = scmp.lt.s32.totalorder %s15, 2
          %s196 = scalar_select %p195, %s15, 2
          %s197 = smul.addr %s196, 8
          %s198 = scalar_lea.vmem %s0, %s197
        $region36: #{tpu_custom_call.1} parent=31 // pred_fallthru
          _
      $region32: #{tpu_custom_call.1} parent=5 // pred_fallthru
        _
      %p199 = scmp.le.s32.totalorder 1, %s15
      %p200 = scmp.lt.s32.totalorder %s15, 4
      %p201 = pnand %p199, %p200
      %p202 = pneg %p201
      // Predicated region
      $region37: #{tpu_custom_call.1} parent=5 // pred_check
        _
      $region38: #{tpu_custom_call.1} parent=5 // pred_check_branch
        %204 = sbr.rel (%p201) target = $region40
      $region39: #{tpu_custom_call.1} parent=5 // pred_region
        %s205 = ssub.s32 %s15, 1
        // Predicated region
        $region41: #{tpu_custom_call.1} parent=39 // pred_check
          %p206 = pneg %p104
        $region42: #{tpu_custom_call.1} parent=39 // pred_check_branch
          %208 = sbr.rel (%p206) target = $region44
        $region43: #{tpu_custom_call.1} parent=39 // pred_region
          %209 = dma.done [#allocation3], 2048
        $region44: #{tpu_custom_call.1} parent=39 // pred_fallthru
          _
        %p210 = scmp.lt.s32.totalorder %s20, 2
        %s211 = scalar_select %p210, %s20, 2
        %s212 = smul.addr %s211, 8
        %s213 = scalar_lea.vmem %s0, %s212
        %p214 = pneg %p41
        %p215 = pneg %p38
        %p216 = pneg %p62
        %p217 = pneg %p59
        %p218 = pneg %p83
        %p219 = pneg %p80
        %p220 = pneg %p104
        %p221 = pneg %p101
        %p222 = pneg %p125
        %p223 = pneg %p122
        %p224 = pneg %p151
        %p225 = pneg %p148
        %s226 = sand.u32 %s138, 1
        %s227 = scalar_lea.sflag [#allocation4], %s226
        %s228 = sand.u32 %s138, 1
        %s229 = smul.addr %s228, 8
        %s230 = scalar_lea.vmem [#allocation5], %s229
        %p231 = scmp.lt.s32.totalorder %s20, 2
        %s232 = scalar_select %p231, %s20, 2
        %s233 = smul.addr %s232, 8
        %s234 = scalar_lea.vmem %s0, %s233
        %v235 = vld [vmem:[%s234] sm:$0xff]
        %v236 = vld [vmem:[%s1] sm:$0x1]
        %238 = vset.pattern.permute.xlu0 0
        %239 = vperm.xlu0 %238, %v235
        %v240 = vpop.permute.xlu0 %239
        %v242 = vlaneseq
        %v243 = vshrl.u32 %v242, 7
        %v244 = vsub.s32 0, %v243
        %v245 = vrot.slane %v236, %v244
        %v246 = vmul.f32 %v240, %v245
        %v247 = vld [vmem:[%s1 + $0x1] sm:$0x1]
        %248 = vset.pattern.permute.xlu0 1
        %249 = vperm.xlu0 %248, %v235
        %v250 = vpop.permute.xlu0 %249
        %v252 = vlaneseq
        %v253 = vshrl.u32 %v252, 7
        %v254 = vsub.s32 0, %v253
        %v255 = vrot.slane %v247, %v254
        %v256 = vmul.f32 %v250, %v255
        %v257 = vadd.f32 %v246, %v256
        %v258 = vld [vmem:[%s2] sm:$0x1]
        %v260 = vlaneseq
        %v261 = vshrl.u32 %v260, 7
        %v262 = vsub.s32 0, %v261
        %v263 = vrot.slane %v258, %v262
        %v265 = vadd.f32 %v257, %v263
        %v266 = vmax.f32 %v265, 0.0
        %v267 = vld [vmem:[#allocation2] sm:$0xff]
        %v268 = vld [vmem:[#allocation2 + $0x8] sm:$0xff]
        %v269 = vld [vmem:[#allocation2 + $0x10] sm:$0xff]
        %v270 = vld [vmem:[#allocation2 + $0x18] sm:$0xff]
        %v271 = vld [vmem:[#allocation2 + $0x20] sm:$0xff]
        %v272 = vld [vmem:[#allocation2 + $0x28] sm:$0xff]
        %v273 = vld [vmem:[#allocation2 + $0x30] sm:$0xff]
        %v274 = vld [vmem:[#allocation2 + $0x38] sm:$0xff]
        %v275 = vld [vmem:[#allocation2 + $0x40] sm:$0xff]
        %v276 = vld [vmem:[#allocation2 + $0x48] sm:$0xff]
        %v277 = vld [vmem:[#allocation2 + $0x50] sm:$0xff]
        %v278 = vld [vmem:[#allocation2 + $0x58] sm:$0xff]
        %v279 = vld [vmem:[#allocation2 + $0x60] sm:$0xff]
        %v280 = vld [vmem:[#allocation2 + $0x68] sm:$0xff]
        %v281 = vld [vmem:[#allocation2 + $0x70] sm:$0xff]
        %v282 = vld [vmem:[#allocation2 + $0x78] sm:$0xff]
        %v283 = vld [vmem:[%s4] sm:$0x1]
        %v285 = vlaneseq
        %v286 = vshrl.u32 %v285, 7
        %v287 = vsub.s32 0, %v286
        %v288 = vrot.slane %v283, %v287
        %290 = vmatprep.subr.mxu0 0.0
        %291 = vmatpush1.msra.mxu0 %v267
        %292 = vmatprep.subr.mxu0 0.0
        %293 = vmatpush1.msra.mxu0 %v268
        %294 = vmatprep.subr.mxu0 0.0
        %295 = vmatpush1.msra.mxu0 %v269
        %296 = vmatprep.subr.mxu0 0.0
        %297 = vmatpush1.msra.mxu0 %v270
        %298 = vmatprep.subr.mxu0 0.0
        %299 = vmatpush1.msra.mxu0 %v271
        %300 = vmatprep.subr.mxu0 0.0
        %301 = vmatpush1.msra.mxu0 %v272
        %302 = vmatprep.subr.mxu0 0.0
        %303 = vmatpush1.msra.mxu0 %v273
        %304 = vmatprep.subr.mxu0 0.0
        %305 = vmatpush1.msra.mxu0 %v274
        %306 = vmatprep.subr.mxu0 0.0
        %307 = vmatpush1.msra.mxu0 %v275
        %308 = vmatprep.subr.mxu0 0.0
        %309 = vmatpush1.msra.mxu0 %v276
        %310 = vmatprep.subr.mxu0 0.0
        %311 = vmatpush1.msra.mxu0 %v277
        %312 = vmatprep.subr.mxu0 0.0
        %313 = vmatpush1.msra.mxu0 %v278
        %314 = vmatprep.subr.mxu0 0.0
        %315 = vmatpush1.msra.mxu0 %v279
        %316 = vmatprep.subr.mxu0 0.0
        %317 = vmatpush1.msra.mxu0 %v280
        %318 = vmatprep.subr.mxu0 0.0
        %319 = vmatpush1.msra.mxu0 %v281
        %320 = vmatprep.subr.mxu0 0.0
        %321 = vmatpush1.msra.mxu0 %v282
        %322 = vmatprep.subr.mxu0 0.0
        %323 = vmatpush1.msra.mxu0 0.0
        %324 = vmatprep.subr.mxu0 0.0
        %325 = vmatpush1.msra.mxu0 0.0
        %326 = vmatprep.subr.mxu0 0.0
        %327 = vmatpush1.msra.mxu0 0.0
        %328 = vmatprep.subr.mxu0 0.0
        %329 = vmatpush1.msra.mxu0 0.0
        %330 = vmatprep.subr.mxu0 0.0
        %331 = vmatpush1.msra.mxu0 0.0
        %332 = vmatprep.subr.mxu0 0.0
        %333 = vmatpush1.msra.mxu0 0.0
        %334 = vmatprep.subr.mxu0 0.0
        %335 = vmatpush1.msra.mxu0 0.0
        %336 = vmatprep.subr.mxu0 0.0
        %337 = vmatpush1.msra.mxu0 0.0
        %338 = vmatprep.subr.mxu0 0.0
        %339 = vmatpush1.msra.mxu0 0.0
        %340 = vmatprep.subr.mxu0 0.0
        %341 = vmatpush1.msra.mxu0 0.0
        %342 = vmatprep.subr.mxu0 0.0
        %343 = vmatpush1.msra.mxu0 0.0
        %344 = vmatprep.subr.mxu0 0.0
        %345 = vmatpush1.msra.mxu0 0.0
        %346 = vmatprep.subr.mxu0 0.0
        %347 = vmatpush1.msra.mxu0 0.0
        %348 = vmatprep.subr.mxu0 0.0
        %349 = vmatpush1.msra.mxu0 0.0
        %350 = vmatprep.subr.mxu0 0.0
        %351 = vmatpush1.msra.mxu0 0.0
        %352 = vmatprep.subr.mxu0 0.0
        %353 = vmatpush1.msra.mxu0 0.0
        %354 = vmatprep.mubr.f32.mxu0 0.0
        %355 = vmatmul.mubr.f32.gmra.mrb[0].mxu0 %v266
        %v356 = vpop.f32.mrb[0].mxu0
        %v357 = vadd.f32 %v288, %v356
        %v358 = vpop.f32.mrb[0].mxu0
        %359 = vdwg.mxu0
        %360 = vst [vmem:[%s230] sm:$0xff] %v357
        %s361 = sand.u32 %s138, 1
        %s362 = scalar_lea.sflag [#allocation4], %s361
        %s363 = sand.u32 %s138, 1
        %s364 = smul.addr %s363, 8
        %s365 = scalar_lea.vmem [#allocation5], %s364
        // Predicated region
        $region45: #{tpu_custom_call.1} parent=39 // pred_check
          %p366 = pneg %p148
        $region46: #{tpu_custom_call.1} parent=39 // pred_check_branch
          %368 = sbr.rel (%p366) target = $region48
        $region47: #{tpu_custom_call.1} parent=39 // pred_region
          %s370 = ssub.s32 128, 128
          %371 = vsyncadd %s362, %s370
          %s372 = smul.addr %s20, 128
          %s373 = scalar_lea.hbm %s5, %s372
          %s375 = sshll.u32 %s365, 4
          %s376 = int_to_ptr.vmem [resolvable:$true] %s375
          %378 = dma.vmem_to_hbm [thread:$0]  %s376, 128, %s373, %s362
        $region48: #{tpu_custom_call.1} parent=39 // pred_fallthru
          _
      $region40: #{tpu_custom_call.1} parent=5 // pred_fallthru
        _
      %p379 = scmp.le.s32.totalorder 2, %s15
      // Predicated region
      $region49: #{tpu_custom_call.1} parent=5 // pred_check
        %p380 = pneg %p379
      $region50: #{tpu_custom_call.1} parent=5 // pred_check_branch
        %382 = sbr.rel (%p380) target = $region52
      $region51: #{tpu_custom_call.1} parent=5 // pred_region
        %s383 = ssub.s32 %s15, 2
        // Predicated region
        $region53: #{tpu_custom_call.1} parent=51 // pred_check
          %p384 = pneg %p154
        $region54: #{tpu_custom_call.1} parent=51 // pred_check_branch
          %386 = sbr.rel (%p384) target = $region56
        $region55: #{tpu_custom_call.1} parent=51 // pred_region
          %s387 = sand.u32 %s139, 1
          %s388 = scalar_lea.sflag [#allocation4], %s387
          %s389 = sand.u32 %s139, 1
          %s390 = smul.addr %s389, 8
          %s391 = scalar_lea.vmem [#allocation5], %s390
          %392 = dma.done %s388, 128
        $region56: #{tpu_custom_call.1} parent=51 // pred_fallthru
          _
      $region52: #{tpu_custom_call.1} parent=5 // pred_fallthru
        _
    $region6: #{tpu_custom_call.1} parent=1 // loop_footer
      %s19 = sadd.s32 1, %s15
    $region7: #{tpu_custom_call.1} parent=1 // loop_footer_branch
      %14 = sbr.rel target = $region3
    $region8: #{tpu_custom_call.1} parent=1 // loop_exit
      _
    %393 = vsyncpa [#allocation3], 1
    %s394 = scalar_lea.sflag [#allocation3], 1
    %395 = vsyncpa %s394, 1
    %396 = vsyncpa [#allocation4], 1
    %s397 = scalar_lea.sflag [#allocation4], 1
    %398 = vsyncpa %s397, 1

</llo_original>
